<compile_context>
chip_gen: v5e
topology: v5e:2x2
jax: 0.10.0
libtpu: 0.0.40
codegen_flags: <defaults>
</compile_context>

<pallas_src>
import jax
import jax.numpy as jnp
from jax.experimental import pallas as pl
from jax.experimental.pallas import tpu as pltpu


def _mlp_softmax_kernel(x_ref, w1_ref, b1_ref, w2_ref, b2_ref, w3_ref, b3_ref, o_ref):
    # Cast the f32 input tile to bf16 in-kernel (free VPU op hidden under DMA);
    # every matmul is bf16 x bf16 with f32 accumulation on the MXU.
    xb = x_ref[...].astype(jnp.bfloat16)

    # Layer 1: Linear + ReLU.   (Dropout == identity in eval/inference mode.)
    h1 = jnp.dot(xb, w1_ref[...], preferred_element_type=jnp.float32) + b1_ref[...]
    h1 = jnp.maximum(h1, 0.0)

    # Layer 2: Linear + ReLU.
    h2 = jnp.dot(h1.astype(jnp.bfloat16), w2_ref[...],
                 preferred_element_type=jnp.float32) + b2_ref[...]
    h2 = jnp.maximum(h2, 0.0)

    # Output layer: Linear + Softmax(dim=-1) over the real classes, exact division.
    logits = jnp.dot(h2.astype(jnp.bfloat16), w3_ref[...],
                     preferred_element_type=jnp.float32) + b3_ref[...]
    m = jnp.max(logits, axis=-1, keepdims=True)
    e = jnp.exp(logits - m)
    s = jnp.sum(e, axis=-1, keepdims=True)
    o_ref[...] = (e / s).astype(o_ref.dtype)


def _pick_block_batch(B):
    # Small batch: one block whose dims equal the array dims (always legal, no padding).
    if B <= 256:
        return B
    # Large batch: target >= 4 pipelined grid steps of 256-512 rows so adjacent steps'
    # DMA overlaps and both v7x TensorCores get work; the ~0.35us/step overhead is
    # fully amortized at this size and VMEM footprint stays well under 1 MiB.
    return min(512, ((pl.cdiv(B, 4) + 7) // 8) * 8)


def estimation_network_forward(x, params, *, block_batch=None):
    """x: (B, input_dim) float32. params: dict of (w1,b1,w2,b2,w3,b3), weights stored (in, out)."""
    w1, b1, w2, b2, w3, b3 = (params[k] for k in ("w1", "b1", "w2", "b2", "w3", "b3"))
    B, in_dim = x.shape
    h1_dim = w1.shape[1]
    h2_dim = w2.shape[1]
    out_dim = w3.shape[1]

    bb = _pick_block_batch(B) if block_batch is None else block_batch
    grid = (pl.cdiv(B, bb),)   # a ragged last block (if any) is masked by Pallas

    # Weights are tiny and resident across the grid: one-off bf16 cast is negligible.
    # x stays f32 in HBM and is cast inside the kernel; biases stay f32.
    w1c, w2c, w3c = (w.astype(jnp.bfloat16) for w in (w1, w2, w3))
    b1c, b2c, b3c = (b.astype(jnp.float32) for b in (b1, b2, b3))

    cost = pl.CostEstimate(
        flops=2 * B * (in_dim * h1_dim + h1_dim * h2_dim + h2_dim * out_dim),
        transcendentals=B * out_dim,
        bytes_accessed=(B * in_dim * 4 + B * out_dim * 4
                        + (w1.size + w2.size + w3.size) * 2
                        + (b1.size + b2.size + b3.size) * 4),
    )

    in_specs = [
        pl.BlockSpec((bb, in_dim), lambda i: (i, 0)),      # x tile (batch-tiled)
        pl.BlockSpec((in_dim, h1_dim), lambda i: (0, 0)),  # w1 (whole, resident)
        pl.BlockSpec((1, h1_dim), lambda i: (0, 0)),       # b1
        pl.BlockSpec((h1_dim, h2_dim), lambda i: (0, 0)),  # w2
        pl.BlockSpec((1, h2_dim), lambda i: (0, 0)),       # b2
        pl.BlockSpec((h2_dim, out_dim), lambda i: (0, 0)), # w3
        pl.BlockSpec((1, out_dim), lambda i: (0, 0)),      # b3
    ]
    out_specs = pl.BlockSpec((bb, out_dim), lambda i: (i, 0))

    return pl.pallas_call(
        _mlp_softmax_kernel,
        out_shape=jax.ShapeDtypeStruct((B, out_dim), jnp.float32),
        grid=grid,
        in_specs=in_specs,
        out_specs=out_specs,
        compiler_params=pltpu.CompilerParams(dimension_semantics=("parallel",)),
        cost_estimate=cost,
    )(x, w1c, b1c, w2c, b2c, w3c, b3c)


def init_params(key, input_dim, output_dim, hidden_dims=(10, 4)):
    """Deterministic PyTorch-style (uniform +/- 1/sqrt(fan_in)) initialization."""
    dims = [input_dim, *hidden_dims, output_dim]
    params = {}
    names = [("w1", "b1"), ("w2", "b2"), ("w3", "b3")]
    for (wn, bn), fan_in, fan_out in zip(names, dims[:-1], dims[1:]):
        key, kw, kb = jax.random.split(key, 3)
        bound = 1.0 / jnp.sqrt(jnp.float32(fan_in))
        # stored as (in, out): kernel computes x @ W + b
        params[wn] = jax.random.uniform(kw, (fan_in, fan_out), jnp.float32, -bound, bound)
        params[bn] = jax.random.uniform(kb, (1, fan_out), jnp.float32, -bound, bound)
    return params


def reference_forward(x, params):
    """Pure-JAX reference (eval mode: dropout = identity), mirroring the kernel's
    bf16 activation/weight rounding with f32 accumulation."""
    c = lambda a: a.astype(jnp.bfloat16).astype(jnp.float32)
    h = jnp.maximum(c(x) @ c(params["w1"]) + params["b1"], 0.0)
    h = jnp.maximum(c(h) @ c(params["w2"]) + params["b2"], 0.0)
    logits = c(h) @ c(params["w3"]) + params["b3"]
    return jax.nn.softmax(logits, axis=-1)


if __name__ == "__main__":
    key = jax.random.PRNGKey(0)
    input_dim, output_dim = 32, 5

    kp, kx1, kx2 = jax.random.split(key, 3)
    params = init_params(kp, input_dim, output_dim, hidden_dims=(10, 4))

    # Case 1: multi-step grid (4 exact blocks of 16 rows) -> exercises the pipelined
    # "parallel" grid path.
    batch1 = 64
    x1 = jax.random.normal(kx1, (batch1, input_dim), jnp.float32)
    out1 = jax.block_until_ready(estimation_network_forward(x1, params, block_batch=16))
    ref1 = reference_forward(x1, params)
    assert out1.shape == (batch1, output_dim)
    assert jnp.allclose(jnp.sum(out1, axis=-1), 1.0, atol=1e-3)
    assert jnp.allclose(out1, ref1, atol=2e-3, rtol=2e-3)

    # Case 2: batch not a multiple of 8 -> single block whose dims equal the array dims
    # (no padding, no post-call slicing copies).
    batch2 = 50
    x2 = jax.random.normal(kx2, (batch2, input_dim), jnp.float32)
    out2 = jax.block_until_ready(estimation_network_forward(x2, params))
    ref2 = reference_forward(x2, params)
    assert out2.shape == (batch2, output_dim)
    assert jnp.allclose(jnp.sum(out2, axis=-1), 1.0, atol=1e-3)
    assert jnp.allclose(out2, ref2, atol=2e-3, rtol=2e-3)

    print("KERNEL_OK")
</pallas_src>

<mosaic_0001>
module attributes {stable_mosaic.version = 11 : i64} {
  func.func @_mlp_softmax_kernel(%arg0: i32, %arg1: memref<16x32xf32, #tpu.memory_space<vmem>>, %arg2: memref<32x10xbf16, #tpu.memory_space<vmem>>, %arg3: memref<1x10xf32, #tpu.memory_space<vmem>>, %arg4: memref<10x4xbf16, #tpu.memory_space<vmem>>, %arg5: memref<1x4xf32, #tpu.memory_space<vmem>>, %arg6: memref<4x5xbf16, #tpu.memory_space<vmem>>, %arg7: memref<1x5xf32, #tpu.memory_space<vmem>>, %arg8: memref<16x5xf32, #tpu.memory_space<vmem>>) attributes {dimension_semantics = [#tpu.dimension_semantics<parallel>], iteration_bounds = array<i64: 4>, scalar_prefetch = 0 : i64, scratch_operands = 0 : i64, tpu.core_type = #tpu.core_type<tc>, window_params = [{transform_indices = @transform_0, window_bounds = array<i64: 16, 32>}, {pipeline_mode = #tpu.pipeline_mode<synchronous>, transform_indices = @transform_1, window_bounds = array<i64: 32, 10>}, {pipeline_mode = #tpu.pipeline_mode<synchronous>, transform_indices = @transform_2, window_bounds = array<i64: 1, 10>}, {pipeline_mode = #tpu.pipeline_mode<synchronous>, transform_indices = @transform_3, window_bounds = array<i64: 10, 4>}, {pipeline_mode = #tpu.pipeline_mode<synchronous>, transform_indices = @transform_4, window_bounds = array<i64: 1, 4>}, {pipeline_mode = #tpu.pipeline_mode<synchronous>, transform_indices = @transform_5, window_bounds = array<i64: 4, 5>}, {pipeline_mode = #tpu.pipeline_mode<synchronous>, transform_indices = @transform_6, window_bounds = array<i64: 1, 5>}, {transform_indices = @transform_7, window_bounds = array<i64: 16, 5>}]} {
    %c0 = arith.constant 0 : index
    %c0_0 = arith.constant 0 : index
    %0 = vector.load %arg1[%c0, %c0_0] : memref<16x32xf32, #tpu.memory_space<vmem>>, vector<16x32xf32>
    %1 = arith.truncf %0 : vector<16x32xf32> to vector<16x32xbf16>
    %c0_1 = arith.constant 0 : index
    %c0_2 = arith.constant 0 : index
    %2 = vector.load %arg2[%c0_1, %c0_2] : memref<32x10xbf16, #tpu.memory_space<vmem>>, vector<32x10xbf16>
    %cst = arith.constant dense<0.000000e+00> : vector<16x10xf32>
    %3 = tpu.matmul %1, %2, %cst {dimension_numbers = #tpu.dot_dimension_numbers<[1], [0], [0], [1], [0, 0, 1, 1], [], []>} : vector<16x32xbf16>, vector<32x10xbf16>, vector<16x10xf32> -> vector<16x10xf32>
    %c0_3 = arith.constant 0 : index
    %c0_4 = arith.constant 0 : index
    %4 = vector.load %arg3[%c0_3, %c0_4] : memref<1x10xf32, #tpu.memory_space<vmem>>, vector<1x10xf32>
    %5 = vector.broadcast %4 : vector<1x10xf32> to vector<16x10xf32>
    %6 = arith.addf %3, %5 : vector<16x10xf32>
    %cst_5 = arith.constant 0.000000e+00 : f32
    %7 = vector.broadcast %cst_5 : f32 to vector<16x10xf32>
    %8 = arith.maximumf %6, %7 : vector<16x10xf32>
    %9 = arith.truncf %8 : vector<16x10xf32> to vector<16x10xbf16>
    %c0_6 = arith.constant 0 : index
    %c0_7 = arith.constant 0 : index
    %10 = vector.load %arg4[%c0_6, %c0_7] : memref<10x4xbf16, #tpu.memory_space<vmem>>, vector<10x4xbf16>
    %cst_8 = arith.constant dense<0.000000e+00> : vector<16x4xf32>
    %11 = tpu.matmul %9, %10, %cst_8 {dimension_numbers = #tpu.dot_dimension_numbers<[1], [0], [0], [1], [0, 0, 1, 1], [], []>} : vector<16x10xbf16>, vector<10x4xbf16>, vector<16x4xf32> -> vector<16x4xf32>
    %c0_9 = arith.constant 0 : index
    %c0_10 = arith.constant 0 : index
    %12 = vector.load %arg5[%c0_9, %c0_10] : memref<1x4xf32, #tpu.memory_space<vmem>>, vector<1x4xf32>
    %13 = vector.broadcast %12 : vector<1x4xf32> to vector<16x4xf32>
    %14 = arith.addf %11, %13 : vector<16x4xf32>
    %cst_11 = arith.constant 0.000000e+00 : f32
    %15 = vector.broadcast %cst_11 : f32 to vector<16x4xf32>
    %16 = arith.maximumf %14, %15 : vector<16x4xf32>
    %17 = arith.truncf %16 : vector<16x4xf32> to vector<16x4xbf16>
    %c0_12 = arith.constant 0 : index
    %c0_13 = arith.constant 0 : index
    %18 = vector.load %arg6[%c0_12, %c0_13] : memref<4x5xbf16, #tpu.memory_space<vmem>>, vector<4x5xbf16>
    %cst_14 = arith.constant dense<0.000000e+00> : vector<16x5xf32>
    %19 = tpu.matmul %17, %18, %cst_14 {dimension_numbers = #tpu.dot_dimension_numbers<[1], [0], [0], [1], [0, 0, 1, 1], [], []>} : vector<16x4xbf16>, vector<4x5xbf16>, vector<16x5xf32> -> vector<16x5xf32>
    %c0_15 = arith.constant 0 : index
    %c0_16 = arith.constant 0 : index
    %20 = vector.load %arg7[%c0_15, %c0_16] : memref<1x5xf32, #tpu.memory_space<vmem>>, vector<1x5xf32>
    %21 = vector.broadcast %20 : vector<1x5xf32> to vector<16x5xf32>
    %22 = arith.addf %19, %21 : vector<16x5xf32>
    %cst_17 = arith.constant dense<0xFF800000> : vector<16xf32>
    %23 = vector.multi_reduction <maximumf>, %22, %cst_17 [1] : vector<16x5xf32> to vector<16xf32>
    %24 = vector.shape_cast %23 : vector<16xf32> to vector<16x1xf32>
    %25 = vector.broadcast %24 : vector<16x1xf32> to vector<16x5xf32>
    %26 = arith.subf %22, %25 : vector<16x5xf32>
    %27 = math.exp %26 : vector<16x5xf32>
    %cst_18 = arith.constant dense<0.000000e+00> : vector<16xf32>
    %28 = vector.multi_reduction <add>, %27, %cst_18 [1] : vector<16x5xf32> to vector<16xf32>
    %29 = vector.shape_cast %28 : vector<16xf32> to vector<16x1xf32>
    %30 = vector.broadcast %29 : vector<16x1xf32> to vector<16x5xf32>
    %31 = arith.divf %27, %30 : vector<16x5xf32>
    %c0_19 = arith.constant 0 : index
    %c0_20 = arith.constant 0 : index
    %32 = vector.load %arg8[%c0_19, %c0_20] : memref<16x5xf32, #tpu.memory_space<vmem>>, vector<16x5xf32>
    tpu.vector_store %arg8[%c0_19, %c0_20], %31 {strides = array<i32>} : memref<16x5xf32, #tpu.memory_space<vmem>>, vector<16x5xf32>,
    return
  }
  func.func @transform_0(%arg0: i32) -> (i32, i32) {
    %c0_i32 = arith.constant 0 : i32
    %c0_i32_0 = arith.constant 0 : i32
    return %arg0, %c0_i32 : i32, i32
  }
  func.func @transform_1(%arg0: i32) -> (i32, i32) {
    %c0_i32 = arith.constant 0 : i32
    %c0_i32_0 = arith.constant 0 : i32
    %c0_i32_1 = arith.constant 0 : i32
    return %c0_i32, %c0_i32_0 : i32, i32
  }
  func.func @transform_2(%arg0: i32) -> (i32, i32) {
    %c0_i32 = arith.constant 0 : i32
    %c0_i32_0 = arith.constant 0 : i32
    %c0_i32_1 = arith.constant 0 : i32
    return %c0_i32, %c0_i32_0 : i32, i32
  }
  func.func @transform_3(%arg0: i32) -> (i32, i32) {
    %c0_i32 = arith.constant 0 : i32
    %c0_i32_0 = arith.constant 0 : i32
    %c0_i32_1 = arith.constant 0 : i32
    return %c0_i32, %c0_i32_0 : i32, i32
  }
  func.func @transform_4(%arg0: i32) -> (i32, i32) {
    %c0_i32 = arith.constant 0 : i32
    %c0_i32_0 = arith.constant 0 : i32
    %c0_i32_1 = arith.constant 0 : i32
    return %c0_i32, %c0_i32_0 : i32, i32
  }
  func.func @transform_5(%arg0: i32) -> (i32, i32) {
    %c0_i32 = arith.constant 0 : i32
    %c0_i32_0 = arith.constant 0 : i32
    %c0_i32_1 = arith.constant 0 : i32
    return %c0_i32, %c0_i32_0 : i32, i32
  }
  func.func @transform_6(%arg0: i32) -> (i32, i32) {
    %c0_i32 = arith.constant 0 : i32
    %c0_i32_0 = arith.constant 0 : i32
    %c0_i32_1 = arith.constant 0 : i32
    return %c0_i32, %c0_i32_0 : i32, i32
  }
  func.func @transform_7(%arg0: i32) -> (i32, i32) {
    %c0_i32 = arith.constant 0 : i32
    %c0_i32_0 = arith.constant 0 : i32
    return %arg0, %c0_i32 : i32, i32
  }
}

</mosaic_0001>

<llo_original>
// kernel: tpu_custom_call.1
$region0: #{tpu_custom_call.1}
  #allocation0 [shape = 'u32[]', space=smem, size = 0x4, offset = 0x4, fixed_abs, tag = 'smem constant byte address 0x4 - core index']
  #allocation1 [shape = 'u32[72,128]{1,0:T(1,128)}', space=vmem, size = 0x9000, scoped, tag = 'internal scratch']
  %s0 = inlined_call_operand.vmem [shape: f32[64,32], index: 0, kind: input, shape index: {}]
  %s1 = inlined_call_operand.vmem [shape: bf16[32,10], index: 1, kind: input, shape index: {}]
  %s2 = inlined_call_operand.vmem [shape: f32[1,10], index: 2, kind: input, shape index: {}]
  %s3 = inlined_call_operand.vmem [shape: bf16[10,4], index: 3, kind: input, shape index: {}]
  %s4 = inlined_call_operand.vmem [shape: f32[1,4], index: 4, kind: input, shape index: {}]
  %s5 = inlined_call_operand.vmem [shape: bf16[4,5], index: 5, kind: input, shape index: {}]
  %s6 = inlined_call_operand.vmem [shape: f32[1,5], index: 6, kind: input, shape index: {}]
  %s7 = inlined_call_operand.vmem [shape: f32[64,5], index: 7, kind: output, shape index: {}]
  %s8 = sld [smem:[#allocation0]]
  $region61: #{tpu_custom_call.1} parent=0
    _
  %s10 = ssub.s32 1, %s8
  %s11 = scalar_select 0, %s10, %s8
  loop: start=0, step=1, limit=6
  $region2: #{tpu_custom_call.1} parent=0 // loop_pre_header
    _
  $region3: #{tpu_custom_call.1} parent=0 // loop_header
    %s13 = sphi 0, %s17
    %p14 = scmp.ge.s32.totalorder %s13, 6
    %s23 = sphi 0, %s25
    %s26 = sphi 0, %s23
    %s27 = sphi 0, %s26
    %s43 = sphi 0, %s27
    %s47 = sphi 0, %s47
    %s49 = sphi 0, %s47
    %s50 = sphi 0, %s49
    %s64 = sphi 0, %s50
    %s68 = sphi 0, %s68
    %s70 = sphi 0, %s68
    %s71 = sphi 0, %s70
    %s85 = sphi 0, %s71
    %s89 = sphi 0, %s89
    %s91 = sphi 0, %s89
    %s92 = sphi 0, %s91
    %s106 = sphi 0, %s92
    %s110 = sphi 0, %s110
    %s112 = sphi 0, %s110
    %s113 = sphi 0, %s112
    %s127 = sphi 0, %s113
    %s131 = sphi 0, %s131
    %s133 = sphi 0, %s131
    %s134 = sphi 0, %s133
    %s148 = sphi 0, %s134
    %s152 = sphi 0, %s152
    %s154 = sphi 0, %s152
    %s155 = sphi 0, %s154
    %s169 = sphi 0, %s155
    %s175 = sphi 0, %s177
    %s178 = sphi 0, %s175
    %s179 = sphi 0, %s178
    %s195 = sphi 0, %s179
  $region4: #{tpu_custom_call.1} parent=0 // loop_header_branch
    %16 = sbr.rel (%p14) target = $region8
  $region5: #{tpu_custom_call.1} parent=0 // loop_body
    %s18 = ssub.s32 %s13, 1
    %s19 = ssub.s32 %s13, 2
    %s20 = sadd.s32 %s13, 1
    %s21 = ssub.s32 %s13, %s20
    %p22 = scmp.eq.s32.totalorder %s21, 0
    %s24 = sadd.s32 %s23, 1
    %s25 = scalar_select %p22, %s23, %s24
    %p28 = pneg %p22
    %p29 = scmp.eq.s32.totalorder %s13, 3
    %p30 = por %p28, %p29
    %p31 = scmp.ne.s32.totalorder %s23, %s26
    %p32 = scmp.eq.s32.totalorder %s13, 0
    %p33 = por %p31, %p32
    %p34 = scmp.ne.s32.totalorder %s23, %s26
    %p35 = scmp.eq.s32.totalorder %s18, 3
    %p36 = por %p34, %p35
    %p37 = scmp.ne.s32.totalorder %s26, %s27
    %p38 = scmp.eq.s32.totalorder %s18, 0
    %p39 = por %p37, %p38
    %p40 = scmp.ne.s32.totalorder %s26, %s27
    %p41 = scmp.eq.s32.totalorder %s19, 3
    %p42 = por %p40, %p41
    %p44 = scmp.ne.s32.totalorder %s27, %s43
    %p45 = scmp.eq.s32.totalorder %s19, 0
    %p46 = por %p44, %p45
    %s48 = sadd.s32 %s47, 1
    %p51 = scmp.eq.s32.totalorder %s13, 3
    %p52 = scmp.ne.s32.totalorder %s47, %s49
    %p53 = scmp.eq.s32.totalorder %s13, 0
    %p54 = por %p52, %p53
    %p55 = scmp.ne.s32.totalorder %s47, %s49
    %p56 = scmp.eq.s32.totalorder %s18, 3
    %p57 = por %p55, %p56
    %p58 = scmp.ne.s32.totalorder %s49, %s50
    %p59 = scmp.eq.s32.totalorder %s18, 0
    %p60 = por %p58, %p59
    %p61 = scmp.ne.s32.totalorder %s49, %s50
    %p62 = scmp.eq.s32.totalorder %s19, 3
    %p63 = por %p61, %p62
    %p65 = scmp.ne.s32.totalorder %s50, %s64
    %p66 = scmp.eq.s32.totalorder %s19, 0
    %p67 = por %p65, %p66
    %s69 = sadd.s32 %s68, 1
    %p72 = scmp.eq.s32.totalorder %s13, 3
    %p73 = scmp.ne.s32.totalorder %s68, %s70
    %p74 = scmp.eq.s32.totalorder %s13, 0
    %p75 = por %p73, %p74
    %p76 = scmp.ne.s32.totalorder %s68, %s70
    %p77 = scmp.eq.s32.totalorder %s18, 3
    %p78 = por %p76, %p77
    %p79 = scmp.ne.s32.totalorder %s70, %s71
    %p80 = scmp.eq.s32.totalorder %s18, 0
    %p81 = por %p79, %p80
    %p82 = scmp.ne.s32.totalorder %s70, %s71
    %p83 = scmp.eq.s32.totalorder %s19, 3
    %p84 = por %p82, %p83
    %p86 = scmp.ne.s32.totalorder %s71, %s85
    %p87 = scmp.eq.s32.totalorder %s19, 0
    %p88 = por %p86, %p87
    %s90 = sadd.s32 %s89, 1
    %p93 = scmp.eq.s32.totalorder %s13, 3
    %p94 = scmp.ne.s32.totalorder %s89, %s91
    %p95 = scmp.eq.s32.totalorder %s13, 0
    %p96 = por %p94, %p95
    %p97 = scmp.ne.s32.totalorder %s89, %s91
    %p98 = scmp.eq.s32.totalorder %s18, 3
    %p99 = por %p97, %p98
    %p100 = scmp.ne.s32.totalorder %s91, %s92
    %p101 = scmp.eq.s32.totalorder %s18, 0
    %p102 = por %p100, %p101
    %p103 = scmp.ne.s32.totalorder %s91, %s92
    %p104 = scmp.eq.s32.totalorder %s19, 3
    %p105 = por %p103, %p104
    %p107 = scmp.ne.s32.totalorder %s92, %s106
    %p108 = scmp.eq.s32.totalorder %s19, 0
    %p109 = por %p107, %p108
    %s111 = sadd.s32 %s110, 1
    %p114 = scmp.eq.s32.totalorder %s13, 3
    %p115 = scmp.ne.s32.totalorder %s110, %s112
    %p116 = scmp.eq.s32.totalorder %s13, 0
    %p117 = por %p115, %p116
    %p118 = scmp.ne.s32.totalorder %s110, %s112
    %p119 = scmp.eq.s32.totalorder %s18, 3
    %p120 = por %p118, %p119
    %p121 = scmp.ne.s32.totalorder %s112, %s113
    %p122 = scmp.eq.s32.totalorder %s18, 0
    %p123 = por %p121, %p122
    %p124 = scmp.ne.s32.totalorder %s112, %s113
    %p125 = scmp.eq.s32.totalorder %s19, 3
    %p126 = por %p124, %p125
    %p128 = scmp.ne.s32.totalorder %s113, %s127
    %p129 = scmp.eq.s32.totalorder %s19, 0
    %p130 = por %p128, %p129
    %s132 = sadd.s32 %s131, 1
    %p135 = scmp.eq.s32.totalorder %s13, 3
    %p136 = scmp.ne.s32.totalorder %s131, %s133
    %p137 = scmp.eq.s32.totalorder %s13, 0
    %p138 = por %p136, %p137
    %p139 = scmp.ne.s32.totalorder %s131, %s133
    %p140 = scmp.eq.s32.totalorder %s18, 3
    %p141 = por %p139, %p140
    %p142 = scmp.ne.s32.totalorder %s133, %s134
    %p143 = scmp.eq.s32.totalorder %s18, 0
    %p144 = por %p142, %p143
    %p145 = scmp.ne.s32.totalorder %s133, %s134
    %p146 = scmp.eq.s32.totalorder %s19, 3
    %p147 = por %p145, %p146
    %p149 = scmp.ne.s32.totalorder %s134, %s148
    %p150 = scmp.eq.s32.totalorder %s19, 0
    %p151 = por %p149, %p150
    %s153 = sadd.s32 %s152, 1
    %p156 = scmp.eq.s32.totalorder %s13, 3
    %p157 = scmp.ne.s32.totalorder %s152, %s154
    %p158 = scmp.eq.s32.totalorder %s13, 0
    %p159 = por %p157, %p158
    %p160 = scmp.ne.s32.totalorder %s152, %s154
    %p161 = scmp.eq.s32.totalorder %s18, 3
    %p162 = por %p160, %p161
    %p163 = scmp.ne.s32.totalorder %s154, %s155
    %p164 = scmp.eq.s32.totalorder %s18, 0
    %p165 = por %p163, %p164
    %p166 = scmp.ne.s32.totalorder %s154, %s155
    %p167 = scmp.eq.s32.totalorder %s19, 3
    %p168 = por %p166, %p167
    %p170 = scmp.ne.s32.totalorder %s155, %s169
    %p171 = scmp.eq.s32.totalorder %s19, 0
    %p172 = por %p170, %p171
    %s173 = ssub.s32 %s13, %s20
    %p174 = scmp.eq.s32.totalorder %s173, 0
    %s176 = sadd.s32 %s175, 1
    %s177 = scalar_select %p174, %s175, %s176
    %p180 = pneg %p174
    %p181 = scmp.eq.s32.totalorder %s13, 3
    %p182 = por %p180, %p181
    %p183 = scmp.ne.s32.totalorder %s175, %s178
    %p184 = scmp.eq.s32.totalorder %s13, 0
    %p185 = por %p183, %p184
    %p186 = scmp.ne.s32.totalorder %s175, %s178
    %p187 = scmp.eq.s32.totalorder %s18, 3
    %p188 = por %p186, %p187
    %p189 = scmp.ne.s32.totalorder %s178, %s179
    %p190 = scmp.eq.s32.totalorder %s18, 0
    %p191 = por %p189, %p190
    %p192 = scmp.ne.s32.totalorder %s178, %s179
    %p193 = scmp.eq.s32.totalorder %s19, 3
    %p194 = por %p192, %p193
    %p196 = scmp.ne.s32.totalorder %s179, %s195
    %p197 = scmp.eq.s32.totalorder %s19, 0
    %p198 = por %p196, %p197
    %p199 = scmp.le.s32.totalorder 1, %s13
    %p200 = scmp.lt.s32.totalorder %s13, 5
    %p201 = pnand %p199, %p200
    %p202 = pneg %p201
    // Predicated region
    $region9: #{tpu_custom_call.1} parent=5 // pred_check
      _
    $region10: #{tpu_custom_call.1} parent=5 // pred_check_branch
      %204 = sbr.rel (%p201) target = $region12
    $region11: #{tpu_custom_call.1} parent=5 // pred_region
      %s205 = ssub.s32 %s13, 1
      // Predicated region
      $region13: #{tpu_custom_call.1} parent=11 // pred_check
        %p206 = pneg %p60
      $region14: #{tpu_custom_call.1} parent=11 // pred_check_branch
        %208 = sbr.rel (%p206) target = $region16
      $region15: #{tpu_custom_call.1} parent=11 // pred_region
        _
      $region16: #{tpu_custom_call.1} parent=11 // pred_fallthru
        _
      // Predicated region
      $region17: #{tpu_custom_call.1} parent=11 // pred_check
        %p209 = pneg %p81
      $region18: #{tpu_custom_call.1} parent=11 // pred_check_branch
        %211 = sbr.rel (%p209) target = $region20
      $region19: #{tpu_custom_call.1} parent=11 // pred_region
        _
      $region20: #{tpu_custom_call.1} parent=11 // pred_fallthru
        _
      // Predicated region
      $region21: #{tpu_custom_call.1} parent=11 // pred_check
        %p212 = pneg %p102
      $region22: #{tpu_custom_call.1} parent=11 // pred_check_branch
        %214 = sbr.rel (%p212) target = $region24
      $region23: #{tpu_custom_call.1} parent=11 // pred_region
        _
      $region24: #{tpu_custom_call.1} parent=11 // pred_fallthru
        _
      // Predicated region
      $region25: #{tpu_custom_call.1} parent=11 // pred_check
        %p215 = pneg %p123
      $region26: #{tpu_custom_call.1} parent=11 // pred_check_branch
        %217 = sbr.rel (%p215) target = $region28
      $region27: #{tpu_custom_call.1} parent=11 // pred_region
        _
      $region28: #{tpu_custom_call.1} parent=11 // pred_fallthru
        _
      // Predicated region
      $region29: #{tpu_custom_call.1} parent=11 // pred_check
        %p218 = pneg %p144
      $region30: #{tpu_custom_call.1} parent=11 // pred_check_branch
        %220 = sbr.rel (%p218) target = $region32
      $region31: #{tpu_custom_call.1} parent=11 // pred_region
        _
      $region32: #{tpu_custom_call.1} parent=11 // pred_fallthru
        _
      // Predicated region
      $region33: #{tpu_custom_call.1} parent=11 // pred_check
        %p221 = pneg %p165
      $region34: #{tpu_custom_call.1} parent=11 // pred_check_branch
        %223 = sbr.rel (%p221) target = $region36
      $region35: #{tpu_custom_call.1} parent=11 // pred_region
        _
      $region36: #{tpu_custom_call.1} parent=11 // pred_fallthru
        _
    $region12: #{tpu_custom_call.1} parent=5 // pred_fallthru
      _
    %p224 = scmp.lt.s32.totalorder %s13, 4
    // Predicated region
    $region37: #{tpu_custom_call.1} parent=5 // pred_check
      %p225 = pneg %p224
    $region38: #{tpu_custom_call.1} parent=5 // pred_check_branch
      %227 = sbr.rel (%p225) target = $region40
    $region39: #{tpu_custom_call.1} parent=5 // pred_region
      // Predicated region
      $region41: #{tpu_custom_call.1} parent=39 // pred_check
        %p228 = pneg %p33
      $region42: #{tpu_custom_call.1} parent=39 // pred_check_branch
        %230 = sbr.rel (%p228) target = $region44
      $region43: #{tpu_custom_call.1} parent=39 // pred_region
        %s231 = smul.u32 2, %s13
        %p232 = scmp.lt.s32.totalorder %s231, 7
        %s233 = scalar_select %p232, %s231, 7
        %s234 = smul.addr %s233, 8
        %s235 = scalar_lea.vmem %s0, %s234
        %s236 = smul.u32 2, %s13
      $region44: #{tpu_custom_call.1} parent=39 // pred_fallthru
        _
    $region40: #{tpu_custom_call.1} parent=5 // pred_fallthru
      _
    %p237 = scmp.le.s32.totalorder 1, %s13
    %p238 = scmp.lt.s32.totalorder %s13, 5
    %p239 = pnand %p237, %p238
    %p240 = pneg %p239
    // Predicated region
    $region45: #{tpu_custom_call.1} parent=5 // pred_check
      _
    $region46: #{tpu_custom_call.1} parent=5 // pred_check_branch
      %242 = sbr.rel (%p239) target = $region48
    $region47: #{tpu_custom_call.1} parent=5 // pred_region
      %s243 = ssub.s32 %s13, 1
      %s244 = smul.u32 2, %s18
      %p245 = scmp.lt.s32.totalorder %s244, 7
      %s246 = scalar_select %p245, %s244, 7
      %s247 = smul.addr %s246, 8
      %s248 = scalar_lea.vmem %s0, %s247
      %p249 = pneg %p39
      %p250 = pneg %p36
      %p251 = pneg %p60
      %p252 = pneg %p57
      %p253 = pneg %p81
      %p254 = pneg %p78
      %p255 = pneg %p102
      %p256 = pneg %p99
      %p257 = pneg %p123
      %p258 = pneg %p120
      %p259 = pneg %p144
      %p260 = pneg %p141
      %p261 = pneg %p165
      %p262 = pneg %p162
      %p263 = pneg %p191
      %p264 = pneg %p188
      %s265 = smul.u32 2, %s18
      %p266 = scmp.lt.s32.totalorder %s265, 7
      %s267 = scalar_select %p266, %s265, 7
      %s268 = smul.addr %s267, 8
      %s269 = scalar_lea.vmem %s7, %s268
      %s270 = smul.u32 2, %s18
      %p271 = scmp.lt.s32.totalorder %s270, 7
      %s272 = scalar_select %p271, %s270, 7
      %s273 = smul.addr %s272, 8
      %s274 = scalar_lea.vmem %s0, %s273
      %s275 = smul.u32 2, %s18
      %s276 = smul.u32 2, %s18
      %p277 = scmp.lt.s32.totalorder %s276, 7
      %s278 = scalar_select %p277, %s276, 7
      %s279 = smul.addr %s278, 8
      %s280 = scalar_lea.vmem %s7, %s279
      %s281 = smul.u32 2, %s18
      %v283 = vld [vmem:[%s274] sm:$0xff]
      %v284 = vld [vmem:[%s274 + $0x8] sm:$0xff]
      %v285 = vpack.c.bf16 %v284, %v283
      %v286 = vld [vmem:[%s1] sm:$0xf]
      %v287 = vld [vmem:[%s1 + $0x4] sm:$0xf]
      %v288 = vld [vmem:[%s1 + $0x8] sm:$0xf]
      %v289 = vld [vmem:[%s1 + $0xc] sm:$0xf]
      %v290 = vld [vmem:[%s2] sm:$0x1]
      %v292 = vperm.slane %v290, 0
      %v298 = vunpack.c.l.b16 %v286
      %v299 = vunpack.c.l.b16 %v287
      %v300 = vunpack.c.l.b16 %v288
      %v301 = vunpack.c.l.b16 %v289
      %v302 = vpack.c.b16 %v299, %v298
      %v303 = vpack.c.b16 %v301, %v300
      %vm306 = vcmask 261120
      %v308 = vsel %vm306, %v285, 0
      %310 = vmatpush.bf16.msra.mxu0 0
      %311 = vmatpush.bf16.msra.mxu0 0
      %312 = vmatpush.bf16.msra.mxu0 0
      %313 = vmatpush.bf16.msra.mxu0 0
      %314 = vmatpush.bf16.msra.mxu0 0
      %315 = vmatpush.bf16.msra.mxu0 0
      %316 = vmatpush.bf16.msra.mxu0 %v303
      %317 = vmatpush.bf16.msra.mxu0 %v302
      %318 = vmatmul.bf16.gmra.mxu0 %v308
      %v319 = vpop.f32.mrf.mxu0
      %v320 = vadd.f32 %v292, %v319
      %v321 = vpop.f32.mrf.mxu0
      %v322 = vadd.f32 %v292, %v321
      %323 = vdwg.mxu0
      %v324 = vmax.f32 %v320, 0.0
      %v325 = vmax.f32 %v322, 0.0
      %v326 = vpack.c.bf16 %v325, %v324
      %v327 = vld [vmem:[%s3] sm:$0xf]
      %v328 = vld [vmem:[%s3 + $0x4] sm:$0x1]
      %v329 = vld [vmem:[%s4] sm:$0x1]
      %v331 = vperm.slane %v329, 0
      %v335 = vunpack.c.l.b16 %v327
      %v336 = vunpack.c.l.b16 %v328
      %v337 = vpack.c.b16 %v336, %v335
      %vm338 = vcmask 80896
      %v340 = vsel %vm338, %v326, 0
      %vm342 = vcmask 1044480
      %v344 = vsel %vm342, %v337, 0
      %346 = vmatpush.bf16.msra.mxu0 0
      %347 = vmatpush.bf16.msra.mxu0 0
      %348 = vmatpush.bf16.msra.mxu0 0
      %349 = vmatpush.bf16.msra.mxu0 0
      %350 = vmatpush.bf16.msra.mxu0 0
      %351 = vmatpush.bf16.msra.mxu0 0
      %352 = vmatpush.bf16.msra.mxu0 0
      %353 = vmatpush.bf16.msra.mxu0 %v344
      %354 = vmatmul.bf16.gmra.mxu0 %v340
      %v355 = vpop.f32.mrf.mxu0
      %v356 = vadd.f32 %v331, %v355
      %v357 = vpop.f32.mrf.mxu0
      %v358 = vadd.f32 %v331, %v357
      %359 = vdwg.mxu0
      %v360 = vmax.f32 %v356, 0.0
      %v361 = vmax.f32 %v358, 0.0
      %v362 = vpack.c.bf16 %v361, %v360
      %v363 = vld [vmem:[%s5] sm:$0x3]
      %v364 = vld [vmem:[%s6] sm:$0x1]
      %v366 = vperm.slane %v364, 0
      %vm368 = vcmask 31744
      %v370 = vsel %vm368, %v362, 0
      %vm372 = vcmask 1041408
      %v374 = vsel %vm372, %v363, 0
      %376 = vmatpush.bf16.msra.mxu0 0
      %377 = vmatpush.bf16.msra.mxu0 0
      %378 = vmatpush.bf16.msra.mxu0 0
      %379 = vmatpush.bf16.msra.mxu0 0
      %380 = vmatpush.bf16.msra.mxu0 0
      %381 = vmatpush.bf16.msra.mxu0 0
      %382 = vmatpush.bf16.msra.mxu0 0
      %383 = vmatpush.bf16.msra.mxu0 %v374
      %384 = vmatmul.bf16.gmra.mxu0 %v370
      %v385 = vpop.f32.mrf.mxu0
      %v386 = vadd.f32 %v366, %v385
      %v387 = vpop.f32.mrf.mxu0
      %v388 = vadd.f32 %v366, %v387
      %389 = vdwg.mxu0
      %vm390 = vcmask 39936
      %v391 = vsel %vm390, %v386, -inf
      %392 = vmax.xlane.f32.xlu0 %v391
      %v393 = vpop.xlane.xlu0 %392
      %v394 = vsel %vm390, %v388, -inf
      %395 = vmax.xlane.f32.xlu0 %v394
      %v396 = vpop.xlane.xlu0 %395
      %v397 = vsub.f32 %v386, %v393
      %v398 = vsub.f32 %v388, %v396
      %v399 = vmul.f32 %v397, 1.442695
      %v400 = vpow.pop %v399
      %v401 = vmul.f32 %v398, 1.442695
      %v402 = vpow.pop %v401
      %v403 = vsel %vm390, %v400, 0.0
      %404 = vadd.xlane.f32.xlu0 %v403
      %v405 = vpop.xlane.xlu0 %404
      %v406 = vsel %vm390, %v402, 0.0
      %407 = vadd.xlane.f32.xlu0 %v406
      %v408 = vpop.xlane.xlu0 %407
      %v409 = vrcp.pop %v405
      %v410 = vmul.f32 %v405, %v409
      %v411 = vsub.f32 1.0, %v410
      %v412 = vmul.f32 %v409, %v411
      %v413 = vadd.f32 %v409, %v412
      %vm414 = vweird.f32 %v405
      %vm415 = vweird.f32 %v409
      %vm416 = vmor %vm414, %vm415
      %v417 = vsel %vm416, %v409, %v413
      %v418 = vand.u32 2147483647, %v405
      %vm419 = vcmp.eq.f32.partialorder %v418, 8.507059e+37
      %v420 = vand.u32 %v405, 2147483648
      %v421 = vor.u32 1.1754944e-38, %v420
      %v422 = vsel %vm419, %v421, %v417
      %v423 = vmul.f32 %v400, %v422
      %v424 = vrcp.pop %v408
      %v425 = vmul.f32 %v408, %v424
      %v426 = vsub.f32 1.0, %v425
      %v427 = vmul.f32 %v424, %v426
      %v428 = vadd.f32 %v424, %v427
      %vm429 = vweird.f32 %v408
      %vm430 = vweird.f32 %v424
      %vm431 = vmor %vm429, %vm430
      %v432 = vsel %vm431, %v424, %v428
      %v433 = vand.u32 2147483647, %v408
      %vm434 = vcmp.eq.f32.partialorder %v433, 8.507059e+37
      %v435 = vand.u32 %v408, 2147483648
      %v436 = vor.u32 1.1754944e-38, %v435
      %v437 = vsel %vm434, %v436, %v432
      %v438 = vmul.f32 %v402, %v437
      %439 = vst.msk [vmem:[%s280] sm:$0xff] %vm390, %v423
      %440 = vst.msk [vmem:[%s280 + $0x8] sm:$0xff] %vm390, %v438
      %s441 = smul.u32 2, %s18
      %p442 = scmp.lt.s32.totalorder %s441, 7
      %s443 = scalar_select %p442, %s441, 7
      %s444 = smul.addr %s443, 8
      %s445 = scalar_lea.vmem %s7, %s444
      // Predicated region
      $region49: #{tpu_custom_call.1} parent=47 // pred_check
        %p446 = pneg %p188
      $region50: #{tpu_custom_call.1} parent=47 // pred_check_branch
        %448 = sbr.rel (%p446) target = $region52
      $region51: #{tpu_custom_call.1} parent=47 // pred_region
        %s449 = smul.u32 2, %s18
      $region52: #{tpu_custom_call.1} parent=47 // pred_fallthru
        _
    $region48: #{tpu_custom_call.1} parent=5 // pred_fallthru
      _
    %p450 = scmp.le.s32.totalorder 2, %s13
    // Predicated region
    $region53: #{tpu_custom_call.1} parent=5 // pred_check
      %p451 = pneg %p450
    $region54: #{tpu_custom_call.1} parent=5 // pred_check_branch
      %453 = sbr.rel (%p451) target = $region56
    $region55: #{tpu_custom_call.1} parent=5 // pred_region
      %s454 = ssub.s32 %s13, 2
      // Predicated region
      $region57: #{tpu_custom_call.1} parent=55 // pred_check
        %p455 = pneg %p194
      $region58: #{tpu_custom_call.1} parent=55 // pred_check_branch
        %457 = sbr.rel (%p455) target = $region60
      $region59: #{tpu_custom_call.1} parent=55 // pred_region
        %s458 = smul.u32 2, %s19
        %p459 = scmp.lt.s32.totalorder %s458, 7
        %s460 = scalar_select %p459, %s458, 7
        %s461 = smul.addr %s460, 8
        %s462 = scalar_lea.vmem %s7, %s461
      $region60: #{tpu_custom_call.1} parent=55 // pred_fallthru
        _
    $region56: #{tpu_custom_call.1} parent=5 // pred_fallthru
      _
  $region6: #{tpu_custom_call.1} parent=0 // loop_footer
    %s17 = sadd.s32 1, %s13
  $region7: #{tpu_custom_call.1} parent=0 // loop_footer_branch
    %12 = sbr.rel target = $region3
  $region8: #{tpu_custom_call.1} parent=0 // loop_exit
    _

</llo_original>
